<compile_context>
chip_gen: v5e
topology: v5e:2x2
jax: 0.10.0
libtpu: 0.0.40
codegen_flags: <defaults>
</compile_context>

<pallas_src>
import functools

import jax
import jax.numpy as jnp
from jax.experimental import pallas as pl
from jax.experimental.pallas import tpu as pltpu


def rune_block_kernel(
    x_ref,      # (TM, D)   f32   input token tile
    ewp_ref,    # (D, D)    bf16  exp((Wp - colmax(Wp)) / tau)
    ewm_ref,    # (D, D)    bf16  exp(-(Wm - colmin(Wm)) / tau)
    wg_ref,     # (D, D)    bf16  gate weights
    wproj_ref,  # (2D, D)   bf16  stacked projection weights [Wproj1; Wproj2]
    vec_ref,    # (8, D)    f32   packed rows: [colmax, colmin, bg, bproj, gamma, beta, 0, 0]
    o_ref,      # (TM, D)   output tile
    hh_ref,     # (TM, 2D)  bf16  scratch: staged [gated_max | gated_diff]
    *,
    tau: float,
    eps: float,
):
    f32 = jnp.float32
    bf16 = jnp.bfloat16
    tiny = jnp.finfo(jnp.float32).tiny
    d = x_ref.shape[-1]
    inv_tau = 1.0 / tau

    x = x_ref[...].astype(f32)                        # (TM, D)

    vecs = vec_ref[...]                               # (8, D) f32
    cwp, cwm = vecs[0:1, :], vecs[1:2, :]
    bg, bproj = vecs[2:3, :], vecs[3:4, :]
    gamma, beta = vecs[4:5, :], vecs[5:6, :]

    # ---- soft tropical max-plus via MXU (max-shifted for stability) ----
    #   tau*logsumexp_i((x[t,i]+W[i,j])/tau)
    #     = rowmax(x)[t] + colmax(W)[j] + tau*log(exp((x-rowmax)/tau) @ exp((W-colmax)/tau))
    row_max = jnp.max(x, axis=-1, keepdims=True)      # (TM, 1)
    ex = jnp.exp((x - row_max) * inv_tau)             # terms <= 1
    sp = jnp.dot(ex.astype(bf16), ewp_ref[...], preferred_element_type=f32)
    trop_max = row_max + cwp + tau * jnp.log(jnp.maximum(sp, tiny))

    # ---- soft tropical min-plus via MXU (mirrored shift) ----
    row_min = jnp.min(x, axis=-1, keepdims=True)      # (TM, 1)
    eu = jnp.exp((row_min - x) * inv_tau)             # terms <= 1
    sm = jnp.dot(eu.astype(bf16), ewm_ref[...], preferred_element_type=f32)
    trop_min = row_min + cwm - tau * jnp.log(jnp.maximum(sm, tiny))

    diff = trop_max - trop_min

    # ---- sigmoid gate (single EUP pass via tanh) ----
    gate_logits = jnp.dot(x.astype(bf16), wg_ref[...], preferred_element_type=f32) + bg
    gate = 0.5 * (1.0 + jnp.tanh(0.5 * gate_logits))

    # aggregated = concat([gate*trop_max, (1-gate)*diff], -1) -> Linear(2D->D)
    # Stage the two halves into one (TM, 2D) bf16 buffer, then a single
    # longer-K MXU dot against the stacked (2D, D) weights.
    hh_ref[:, :d] = (gate * trop_max).astype(bf16)
    hh_ref[:, d:] = ((1.0 - gate) * diff).astype(bf16)
    projected = jnp.dot(hh_ref[...], wproj_ref[...], preferred_element_type=f32) + bproj

    # dropout == identity in eval mode.

    # ---- residual + LayerNorm ----
    h = x + projected
    mu = jnp.mean(h, axis=-1, keepdims=True)
    var = jnp.mean((h - mu) * (h - mu), axis=-1, keepdims=True)
    y = (h - mu) * jax.lax.rsqrt(var + eps) * gamma + beta

    o_ref[...] = y.astype(o_ref.dtype)


def _round_up(v: int, m: int) -> int:
    return ((v + m - 1) // m) * m


def rune_block(x, params, *, tau: float = 0.2, eps: float = 1e-5,
               tm: int | None = None, out_dtype=None):
    """x: [B, N, D] float32.  Returns [B, N, D]."""
    B, N, D = x.shape
    T = B * N
    x2d = x.reshape(T, D)
    out_dtype = x.dtype if out_dtype is None else out_dtype

    f32, bf16 = jnp.float32, jnp.bfloat16

    # ---- one-time (outside the grid) exp-transformed tropical weights ----
    wp = params["wp"].astype(f32)
    col_max_p = jnp.max(wp, axis=0, keepdims=True)                # (1, D)
    ewp = jnp.exp((wp - col_max_p) / tau).astype(bf16)            # (D, D)

    wm = params["wm"].astype(f32)
    col_min_m = jnp.min(wm, axis=0, keepdims=True)                # (1, D)
    ewm = jnp.exp(-(wm - col_min_m) / tau).astype(bf16)           # (D, D)

    wg = params["wg"].astype(bf16)
    wproj = jnp.concatenate(
        [params["wproj1"], params["wproj2"]], axis=0).astype(bf16)  # (2D, D)

    # Pack the six (1, D) f32 vectors into one sublane-aligned (8, D) buffer.
    vecs = jnp.concatenate(
        [col_max_p,
         col_min_m,
         params["bg"].reshape(1, D).astype(f32),
         params["bproj"].reshape(1, D).astype(f32),
         params["gamma"].reshape(1, D).astype(f32),
         params["beta"].reshape(1, D).astype(f32),
         jnp.zeros((2, D), f32)],
        axis=0)                                                    # (8, D)

    # ---- generation-aware token tile + VMEM budget ----
    try:
        vmem_cap = int(pltpu.get_tpu_info().vmem_capacity_bytes)
    except Exception:
        vmem_cap = 64 * 1024 * 1024            # conservative (v7x per-TC)
    usable = int(vmem_cap * 0.8)               # headroom for Mosaic scratch/sems

    if tm is None:
        tm = 512 if usable >= 80 * 1024 * 1024 else 256   # v5e/v6e vs v7x

    # Double-buffered weight residents (5*D^2 bf16 + packed vecs).
    weight_bytes = 2 * (5 * D * D * 2 + 8 * D * 4)

    def vmem_budget(t):
        io = 2 * 2 * t * D * 4                 # x + out tiles, double-buffered
        hh = t * 2 * D * 2                     # bf16 staging scratch
        tmp = 12 * t * D * 4                   # f32 temporaries / spill headroom
        return weight_bytes + io + hh + tmp

    while tm > 128 and vmem_budget(tm) > usable:
        tm //= 2

    # v7x has 2 TensorCores: keep >= 2 grid steps when possible so the
    # 'parallel' token axis can shard across both cores (harmless elsewhere).
    if T >= 256:
        tm = min(tm, _round_up(pl.cdiv(T, 2), 8))

    tm = min(tm, T)
    if tm < T:
        tm = max(8, (tm // 8) * 8)   # sublane-aligned; cdiv grid handles ragged tail

    grid = (pl.cdiv(T, tm),)
    vmem_limit = int(max(32 * 1024 * 1024,
                         min(usable, vmem_budget(tm) + (4 << 20))))

    kernel = functools.partial(rune_block_kernel, tau=float(tau), eps=float(eps))
    inv = lambda shape: pl.BlockSpec(shape, lambda i: (0, 0))   # grid-invariant

    out = pl.pallas_call(
        kernel,
        out_shape=jax.ShapeDtypeStruct((T, D), out_dtype),
        grid_spec=pltpu.PrefetchScalarGridSpec(
            num_scalar_prefetch=0,
            grid=grid,
            in_specs=[
                pl.BlockSpec((tm, D), lambda i: (i, 0)),   # x tile
                inv((D, D)),                               # exp max-plus weights
                inv((D, D)),                               # exp min-plus weights
                inv((D, D)),                               # Wg
                inv((2 * D, D)),                           # stacked Wproj
                inv((8, D)),                               # packed vectors
            ],
            out_specs=pl.BlockSpec((tm, D), lambda i: (i, 0)),
            scratch_shapes=[pltpu.VMEM((tm, 2 * D), jnp.bfloat16)],
        ),
        compiler_params=pltpu.CompilerParams(
            dimension_semantics=("parallel",),
            vmem_limit_bytes=vmem_limit,
        ),
    )(x2d, ewp, ewm, wg, wproj, vecs)
    return out.reshape(B, N, D)


def rune_block_ref(x, params, *, tau: float = 0.2, eps: float = 1e-5):
    """Pure-JAX f32 reference (broadcast logsumexp formulation)."""
    x = x.astype(jnp.float32)
    wp, wm = params["wp"], params["wm"]
    s_max = (x[..., :, None] + wp[None, None, :, :]) / tau        # (B,N,D,D)
    trop_max = tau * jax.nn.logsumexp(s_max, axis=-2)
    s_min = -(x[..., :, None] + wm[None, None, :, :]) / tau
    trop_min = -tau * jax.nn.logsumexp(s_min, axis=-2)
    gate = jax.nn.sigmoid(x @ params["wg"] + params["bg"])
    half_a = gate * trop_max
    half_b = (1.0 - gate) * (trop_max - trop_min)
    projected = half_a @ params["wproj1"] + half_b @ params["wproj2"] + params["bproj"]
    h = x + projected
    mu = h.mean(-1, keepdims=True)
    var = ((h - mu) ** 2).mean(-1, keepdims=True)
    return (h - mu) * jax.lax.rsqrt(var + eps) * params["gamma"] + params["beta"]


def init_params(key, dim):
    ks = jax.random.split(key, 6)
    scale = 0.05
    return {
        "wp":     scale * jax.random.normal(ks[0], (dim, dim), jnp.float32),
        "wm":     scale * jax.random.normal(ks[1], (dim, dim), jnp.float32),
        "wg":     scale * jax.random.normal(ks[2], (dim, dim), jnp.float32),
        "bg":     jnp.zeros((1, dim), jnp.float32),
        "wproj1": scale * jax.random.normal(ks[3], (dim, dim), jnp.float32),
        "wproj2": scale * jax.random.normal(ks[4], (dim, dim), jnp.float32),
        "bproj":  jnp.zeros((1, dim), jnp.float32),
        "gamma":  jnp.ones((1, dim), jnp.float32),
        "beta":   jnp.zeros((1, dim), jnp.float32),
    }


if __name__ == "__main__":
    key = jax.random.PRNGKey(0)
    kx, kp, kx2 = jax.random.split(key, 3)

    # Primary small test (matches the module's [B, N, dim] layout).
    B, N, D = 2, 8, 32
    x = jax.random.normal(kx, (B, N, D), jnp.float32)
    params = init_params(kp, D)

    y = jax.block_until_ready(rune_block(x, params, tau=0.2))
    y_ref = rune_block_ref(x, params, tau=0.2)
    assert y.shape == (B, N, D)
    assert bool(jnp.all(jnp.isfinite(y)))
    err = float(jnp.max(jnp.abs(y - y_ref)))
    assert err < 1e-1, f"kernel deviates from reference: {err}"

    # Ragged-T test: T = 602 is not a multiple of the tile; exercises the
    # cdiv grid with a padded last block.
    B2, N2 = 2, 301
    x2 = jax.random.normal(kx2, (B2, N2, D), jnp.float32)
    y2 = jax.block_until_ready(rune_block(x2, params, tau=0.2))
    y2_ref = rune_block_ref(x2, params, tau=0.2)
    assert y2.shape == (B2, N2, D)
    assert bool(jnp.all(jnp.isfinite(y2)))
    err2 = float(jnp.max(jnp.abs(y2 - y2_ref)))
    assert err2 < 1e-1, f"ragged-grid kernel deviates from reference: {err2}"

    print("KERNEL_OK")
</pallas_src>

<mosaic_0001>
module attributes {stable_mosaic.version = 11 : i64} {
  func.func @rune_block_kernel(%arg0: i32, %arg1: memref<16x32xf32, #tpu.memory_space<vmem>>, %arg2: memref<32x32xbf16, #tpu.memory_space<vmem>>, %arg3: memref<32x32xbf16, #tpu.memory_space<vmem>>, %arg4: memref<32x32xbf16, #tpu.memory_space<vmem>>, %arg5: memref<64x32xbf16, #tpu.memory_space<vmem>>, %arg6: memref<8x32xf32, #tpu.memory_space<vmem>>, %arg7: memref<16x32xf32, #tpu.memory_space<vmem>>, %arg8: memref<16x64xbf16, #tpu.memory_space<vmem>>) attributes {dimension_semantics = [#tpu.dimension_semantics<parallel>], iteration_bounds = array<i64: 1>, scalar_prefetch = 0 : i64, scratch_operands = 1 : i64, tpu.core_type = #tpu.core_type<tc>, window_params = [{transform_indices = @transform_0, window_bounds = array<i64: 16, 32>}, {pipeline_mode = #tpu.pipeline_mode<synchronous>, transform_indices = @transform_1, window_bounds = array<i64: 32, 32>}, {pipeline_mode = #tpu.pipeline_mode<synchronous>, transform_indices = @transform_2, window_bounds = array<i64: 32, 32>}, {pipeline_mode = #tpu.pipeline_mode<synchronous>, transform_indices = @transform_3, window_bounds = array<i64: 32, 32>}, {pipeline_mode = #tpu.pipeline_mode<synchronous>, transform_indices = @transform_4, window_bounds = array<i64: 64, 32>}, {pipeline_mode = #tpu.pipeline_mode<synchronous>, transform_indices = @transform_5, window_bounds = array<i64: 8, 32>}, {transform_indices = @transform_6, window_bounds = array<i64: 16, 32>}]} {
    %c0 = arith.constant 0 : index
    %c0_0 = arith.constant 0 : index
    %0 = vector.load %arg1[%c0, %c0_0] : memref<16x32xf32, #tpu.memory_space<vmem>>, vector<16x32xf32>
    %c0_1 = arith.constant 0 : index
    %c0_2 = arith.constant 0 : index
    %1 = vector.load %arg6[%c0_1, %c0_2] : memref<8x32xf32, #tpu.memory_space<vmem>>, vector<8x32xf32>
    %2 = vector.extract_strided_slice %1 {offsets = [0, 0], sizes = [1, 32], strides = [1, 1]} : vector<8x32xf32> to vector<1x32xf32>
    %3 = vector.extract_strided_slice %1 {offsets = [1, 0], sizes = [1, 32], strides = [1, 1]} : vector<8x32xf32> to vector<1x32xf32>
    %4 = vector.extract_strided_slice %1 {offsets = [2, 0], sizes = [1, 32], strides = [1, 1]} : vector<8x32xf32> to vector<1x32xf32>
    %5 = vector.extract_strided_slice %1 {offsets = [3, 0], sizes = [1, 32], strides = [1, 1]} : vector<8x32xf32> to vector<1x32xf32>
    %6 = vector.extract_strided_slice %1 {offsets = [4, 0], sizes = [1, 32], strides = [1, 1]} : vector<8x32xf32> to vector<1x32xf32>
    %7 = vector.extract_strided_slice %1 {offsets = [5, 0], sizes = [1, 32], strides = [1, 1]} : vector<8x32xf32> to vector<1x32xf32>
    %cst = arith.constant dense<0xFF800000> : vector<16xf32>
    %8 = vector.multi_reduction <maximumf>, %0, %cst [1] : vector<16x32xf32> to vector<16xf32>
    %9 = vector.shape_cast %8 : vector<16xf32> to vector<16x1xf32>
    %10 = vector.broadcast %9 : vector<16x1xf32> to vector<16x32xf32>
    %11 = arith.subf %0, %10 : vector<16x32xf32>
    %cst_3 = arith.constant 5.000000e+00 : f32
    %12 = vector.broadcast %cst_3 : f32 to vector<16x32xf32>
    %13 = arith.mulf %11, %12 : vector<16x32xf32>
    %14 = math.exp %13 : vector<16x32xf32>
    %15 = arith.truncf %14 : vector<16x32xf32> to vector<16x32xbf16>
    %c0_4 = arith.constant 0 : index
    %c0_5 = arith.constant 0 : index
    %16 = vector.load %arg2[%c0_4, %c0_5] : memref<32x32xbf16, #tpu.memory_space<vmem>>, vector<32x32xbf16>
    %cst_6 = arith.constant dense<0.000000e+00> : vector<16x32xf32>
    %17 = tpu.matmul %15, %16, %cst_6 {dimension_numbers = #tpu.dot_dimension_numbers<[1], [0], [0], [1], [0, 0, 1, 1], [], []>} : vector<16x32xbf16>, vector<32x32xbf16>, vector<16x32xf32> -> vector<16x32xf32>
    %18 = vector.broadcast %9 : vector<16x1xf32> to vector<16x32xf32>
    %19 = vector.broadcast %2 : vector<1x32xf32> to vector<16x32xf32>
    %20 = arith.addf %18, %19 : vector<16x32xf32>
    %cst_7 = arith.constant 1.17549435E-38 : f32
    %21 = vector.broadcast %cst_7 : f32 to vector<16x32xf32>
    %22 = arith.maximumf %17, %21 : vector<16x32xf32>
    %23 = math.log %22 : vector<16x32xf32>
    %cst_8 = arith.constant 2.000000e-01 : f32
    %24 = vector.broadcast %cst_8 : f32 to vector<16x32xf32>
    %25 = arith.mulf %24, %23 : vector<16x32xf32>
    %26 = arith.addf %20, %25 : vector<16x32xf32>
    %cst_9 = arith.constant dense<0x7F800000> : vector<16xf32>
    %27 = vector.multi_reduction <minimumf>, %0, %cst_9 [1] : vector<16x32xf32> to vector<16xf32>
    %28 = vector.shape_cast %27 : vector<16xf32> to vector<16x1xf32>
    %29 = vector.broadcast %28 : vector<16x1xf32> to vector<16x32xf32>
    %30 = arith.subf %29, %0 : vector<16x32xf32>
    %cst_10 = arith.constant 5.000000e+00 : f32
    %31 = vector.broadcast %cst_10 : f32 to vector<16x32xf32>
    %32 = arith.mulf %30, %31 : vector<16x32xf32>
    %33 = math.exp %32 : vector<16x32xf32>
    %34 = arith.truncf %33 : vector<16x32xf32> to vector<16x32xbf16>
    %c0_11 = arith.constant 0 : index
    %c0_12 = arith.constant 0 : index
    %35 = vector.load %arg3[%c0_11, %c0_12] : memref<32x32xbf16, #tpu.memory_space<vmem>>, vector<32x32xbf16>
    %cst_13 = arith.constant dense<0.000000e+00> : vector<16x32xf32>
    %36 = tpu.matmul %34, %35, %cst_13 {dimension_numbers = #tpu.dot_dimension_numbers<[1], [0], [0], [1], [0, 0, 1, 1], [], []>} : vector<16x32xbf16>, vector<32x32xbf16>, vector<16x32xf32> -> vector<16x32xf32>
    %37 = vector.broadcast %28 : vector<16x1xf32> to vector<16x32xf32>
    %38 = vector.broadcast %3 : vector<1x32xf32> to vector<16x32xf32>
    %39 = arith.addf %37, %38 : vector<16x32xf32>
    %cst_14 = arith.constant 1.17549435E-38 : f32
    %40 = vector.broadcast %cst_14 : f32 to vector<16x32xf32>
    %41 = arith.maximumf %36, %40 : vector<16x32xf32>
    %42 = math.log %41 : vector<16x32xf32>
    %cst_15 = arith.constant 2.000000e-01 : f32
    %43 = vector.broadcast %cst_15 : f32 to vector<16x32xf32>
    %44 = arith.mulf %43, %42 : vector<16x32xf32>
    %45 = arith.subf %39, %44 : vector<16x32xf32>
    %46 = arith.subf %26, %45 : vector<16x32xf32>
    %47 = arith.truncf %0 : vector<16x32xf32> to vector<16x32xbf16>
    %c0_16 = arith.constant 0 : index
    %c0_17 = arith.constant 0 : index
    %48 = vector.load %arg4[%c0_16, %c0_17] : memref<32x32xbf16, #tpu.memory_space<vmem>>, vector<32x32xbf16>
    %cst_18 = arith.constant dense<0.000000e+00> : vector<16x32xf32>
    %49 = tpu.matmul %47, %48, %cst_18 {dimension_numbers = #tpu.dot_dimension_numbers<[1], [0], [0], [1], [0, 0, 1, 1], [], []>} : vector<16x32xbf16>, vector<32x32xbf16>, vector<16x32xf32> -> vector<16x32xf32>
    %50 = vector.broadcast %4 : vector<1x32xf32> to vector<16x32xf32>
    %51 = arith.addf %49, %50 : vector<16x32xf32>
    %cst_19 = arith.constant 5.000000e-01 : f32
    %52 = vector.broadcast %cst_19 : f32 to vector<16x32xf32>
    %53 = arith.mulf %52, %51 : vector<16x32xf32>
    %54 = math.tanh %53 : vector<16x32xf32>
    %cst_20 = arith.constant 1.000000e+00 : f32
    %55 = vector.broadcast %cst_20 : f32 to vector<16x32xf32>
    %56 = arith.addf %55, %54 : vector<16x32xf32>
    %cst_21 = arith.constant 5.000000e-01 : f32
    %57 = vector.broadcast %cst_21 : f32 to vector<16x32xf32>
    %58 = arith.mulf %57, %56 : vector<16x32xf32>
    %59 = arith.mulf %58, %26 : vector<16x32xf32>
    %60 = arith.truncf %59 : vector<16x32xf32> to vector<16x32xbf16>
    %c0_22 = arith.constant 0 : index
    %c0_23 = arith.constant 0 : index
    %61 = vector.load %arg8[%c0_22, %c0_23] : memref<16x64xbf16, #tpu.memory_space<vmem>>, vector<16x32xbf16>
    tpu.vector_store %arg8[%c0_22, %c0_23], %60 {strides = array<i32>} : memref<16x64xbf16, #tpu.memory_space<vmem>>, vector<16x32xbf16>,
    %cst_24 = arith.constant 1.000000e+00 : f32
    %62 = vector.broadcast %cst_24 : f32 to vector<16x32xf32>
    %63 = arith.subf %62, %58 : vector<16x32xf32>
    %64 = arith.mulf %63, %46 : vector<16x32xf32>
    %65 = arith.truncf %64 : vector<16x32xf32> to vector<16x32xbf16>
    %c0_25 = arith.constant 0 : index
    %c32 = arith.constant 32 : index
    %66 = vector.load %arg8[%c0_25, %c32] : memref<16x64xbf16, #tpu.memory_space<vmem>>, vector<16x32xbf16>
    tpu.vector_store %arg8[%c0_25, %c32], %65 {strides = array<i32>} : memref<16x64xbf16, #tpu.memory_space<vmem>>, vector<16x32xbf16>,
    %c0_26 = arith.constant 0 : index
    %c0_27 = arith.constant 0 : index
    %67 = vector.load %arg8[%c0_26, %c0_27] : memref<16x64xbf16, #tpu.memory_space<vmem>>, vector<16x64xbf16>
    %c0_28 = arith.constant 0 : index
    %c0_29 = arith.constant 0 : index
    %68 = vector.load %arg5[%c0_28, %c0_29] : memref<64x32xbf16, #tpu.memory_space<vmem>>, vector<64x32xbf16>
    %cst_30 = arith.constant dense<0.000000e+00> : vector<16x32xf32>
    %69 = tpu.matmul %67, %68, %cst_30 {dimension_numbers = #tpu.dot_dimension_numbers<[1], [0], [0], [1], [0, 0, 1, 1], [], []>} : vector<16x64xbf16>, vector<64x32xbf16>, vector<16x32xf32> -> vector<16x32xf32>
    %70 = vector.broadcast %5 : vector<1x32xf32> to vector<16x32xf32>
    %71 = arith.addf %69, %70 : vector<16x32xf32>
    %72 = arith.addf %0, %71 : vector<16x32xf32>
    %cst_31 = arith.constant dense<0.000000e+00> : vector<16xf32>
    %73 = vector.multi_reduction <add>, %72, %cst_31 [1] : vector<16x32xf32> to vector<16xf32>
    %74 = vector.shape_cast %73 : vector<16xf32> to vector<16x1xf32>
    %cst_32 = arith.constant 3.200000e+01 : f32
    %75 = vector.broadcast %cst_32 : f32 to vector<16x1xf32>
    %76 = arith.divf %74, %75 : vector<16x1xf32>
    %77 = vector.broadcast %76 : vector<16x1xf32> to vector<16x32xf32>
    %78 = arith.subf %72, %77 : vector<16x32xf32>
    %79 = vector.broadcast %76 : vector<16x1xf32> to vector<16x32xf32>
    %80 = arith.subf %72, %79 : vector<16x32xf32>
    %81 = arith.mulf %78, %80 : vector<16x32xf32>
    %cst_33 = arith.constant dense<0.000000e+00> : vector<16xf32>
    %82 = vector.multi_reduction <add>, %81, %cst_33 [1] : vector<16x32xf32> to vector<16xf32>
    %83 = vector.shape_cast %82 : vector<16xf32> to vector<16x1xf32>
    %cst_34 = arith.constant 3.200000e+01 : f32
    %84 = vector.broadcast %cst_34 : f32 to vector<16x1xf32>
    %85 = arith.divf %83, %84 : vector<16x1xf32>
    %86 = vector.broadcast %76 : vector<16x1xf32> to vector<16x32xf32>
    %87 = arith.subf %72, %86 : vector<16x32xf32>
    %cst_35 = arith.constant 9.99999974E-6 : f32
    %88 = vector.broadcast %cst_35 : f32 to vector<16x1xf32>
    %89 = arith.addf %85, %88 : vector<16x1xf32>
    %90 = math.rsqrt %89 : vector<16x1xf32>
    %91 = vector.broadcast %90 : vector<16x1xf32> to vector<16x32xf32>
    %92 = arith.mulf %87, %91 : vector<16x32xf32>
    %93 = vector.broadcast %6 : vector<1x32xf32> to vector<16x32xf32>
    %94 = arith.mulf %92, %93 : vector<16x32xf32>
    %95 = vector.broadcast %7 : vector<1x32xf32> to vector<16x32xf32>
    %96 = arith.addf %94, %95 : vector<16x32xf32>
    %c0_36 = arith.constant 0 : index
    %c0_37 = arith.constant 0 : index
    %97 = vector.load %arg7[%c0_36, %c0_37] : memref<16x32xf32, #tpu.memory_space<vmem>>, vector<16x32xf32>
    tpu.vector_store %arg7[%c0_36, %c0_37], %96 {strides = array<i32>} : memref<16x32xf32, #tpu.memory_space<vmem>>, vector<16x32xf32>,
    return
  }
  func.func @transform_0(%arg0: i32) -> (i32, i32) {
    %c0_i32 = arith.constant 0 : i32
    %c0_i32_0 = arith.constant 0 : i32
    return %arg0, %c0_i32 : i32, i32
  }
  func.func @transform_1(%arg0: i32) -> (i32, i32) {
    %c0_i32 = arith.constant 0 : i32
    %c0_i32_0 = arith.constant 0 : i32
    %c0_i32_1 = arith.constant 0 : i32
    return %c0_i32, %c0_i32_0 : i32, i32
  }
  func.func @transform_2(%arg0: i32) -> (i32, i32) {
    %c0_i32 = arith.constant 0 : i32
    %c0_i32_0 = arith.constant 0 : i32
    %c0_i32_1 = arith.constant 0 : i32
    return %c0_i32, %c0_i32_0 : i32, i32
  }
  func.func @transform_3(%arg0: i32) -> (i32, i32) {
    %c0_i32 = arith.constant 0 : i32
    %c0_i32_0 = arith.constant 0 : i32
    %c0_i32_1 = arith.constant 0 : i32
    return %c0_i32, %c0_i32_0 : i32, i32
  }
  func.func @transform_4(%arg0: i32) -> (i32, i32) {
    %c0_i32 = arith.constant 0 : i32
    %c0_i32_0 = arith.constant 0 : i32
    %c0_i32_1 = arith.constant 0 : i32
    return %c0_i32, %c0_i32_0 : i32, i32
  }
  func.func @transform_5(%arg0: i32) -> (i32, i32) {
    %c0_i32 = arith.constant 0 : i32
    %c0_i32_0 = arith.constant 0 : i32
    %c0_i32_1 = arith.constant 0 : i32
    return %c0_i32, %c0_i32_0 : i32, i32
  }
  func.func @transform_6(%arg0: i32) -> (i32, i32) {
    %c0_i32 = arith.constant 0 : i32
    %c0_i32_0 = arith.constant 0 : i32
    return %arg0, %c0_i32 : i32, i32
  }
}

</mosaic_0001>

<llo_original>
// kernel: tpu_custom_call.1
$region0: #{tpu_custom_call.1}
  #allocation0 [shape = 'u32[]', space=smem, size = 0x4, offset = 0x4, fixed_abs, tag = 'smem constant byte address 0x4 - core index']
  #allocation1 [shape = 'u32[72,128]{1,0:T(1,128)}', space=vmem, size = 0x9000, scoped, tag = 'internal scratch']
  #allocation2 [shape = 'bf16[16,64]{1,0:T(8,128)(2,1)}', space=vmem, size = 0x1000, scoped, tag = 'scratch operand']
  %s0 = inlined_call_operand.vmem [shape: f32[16,32], index: 0, kind: input, shape index: {}]
  %s1 = inlined_call_operand.vmem [shape: bf16[32,32], index: 1, kind: input, shape index: {}]
  %s2 = inlined_call_operand.vmem [shape: bf16[32,32], index: 2, kind: input, shape index: {}]
  %s3 = inlined_call_operand.hbm [shape: bf16[32,32], index: 3, kind: input, shape index: {}]
  %s4 = inlined_call_operand.vmem [shape: bf16[64,32], index: 4, kind: input, shape index: {}]
  %s5 = inlined_call_operand.hbm [shape: f32[8,32], index: 5, kind: input, shape index: {}]
  %s6 = inlined_call_operand.hbm [shape: f32[16,32], index: 6, kind: output, shape index: {}]
  %s7 = sld [smem:[#allocation0]]
  $region42: #{tpu_custom_call.1} parent=0
    _
  %s9 = ssub.s32 1, %s7
  %s10 = scalar_select 0, %s9, %s7
  $region1: #{tpu_custom_call.1} parent=0
    #allocation3 [shape = 'u8[8192]{0}', space=vmem, size = 0x2000, scoped, tag = 'input window, operand 3, single buffered']
    #allocation4 [shape = 's32[1]{0}', space=sflag, size = 0x4, scoped, tag = 'scoped memory for tpu_custom_call.1']
    #allocation5 [shape = 's32[1]{0}', space=sflag, size = 0x4, scoped, tag = 'scoped memory for tpu_custom_call.1']
    #allocation6 [shape = 'u8[4096]{0}', space=vmem, size = 0x1000, scoped, tag = 'input window, operand 5, single buffered']
    #allocation7 [shape = 's32[1]{0}', space=sflag, size = 0x4, scoped, tag = 'scoped memory for tpu_custom_call.1']
    #allocation8 [shape = 'u8[8192]{0}', space=vmem, size = 0x2000, scoped, tag = 'output window, operand 0, single buffered']
    %11 = vsyncpa [#allocation4], 0
    %12 = vsyncpa [#allocation7], 0
    %13 = vsyncpa [#allocation5], 0
    // Predicated region
    $region2: #{tpu_custom_call.1} parent=1 // pred_check
      _
    $region3: #{tpu_custom_call.1} parent=1 // pred_check_branch
      %15 = sbr.rel (0) target = $region5
    $region4: #{tpu_custom_call.1} parent=1 // pred_region
      _
    $region5: #{tpu_custom_call.1} parent=1 // pred_fallthru
      _
    // Predicated region
    $region6: #{tpu_custom_call.1} parent=1 // pred_check
      _
    $region7: #{tpu_custom_call.1} parent=1 // pred_check_branch
      %17 = sbr.rel (0) target = $region9
    $region8: #{tpu_custom_call.1} parent=1 // pred_region
      _
    $region9: #{tpu_custom_call.1} parent=1 // pred_fallthru
      _
    // Predicated region
    $region10: #{tpu_custom_call.1} parent=1 // pred_check
      _
    $region11: #{tpu_custom_call.1} parent=1 // pred_check_branch
      %19 = sbr.rel (0) target = $region13
    $region12: #{tpu_custom_call.1} parent=1 // pred_region
      _
    $region13: #{tpu_custom_call.1} parent=1 // pred_fallthru
      _
    // Predicated region
    $region14: #{tpu_custom_call.1} parent=1 // pred_check
      _
    $region15: #{tpu_custom_call.1} parent=1 // pred_check_branch
      %21 = sbr.rel (0) target = $region17
    $region16: #{tpu_custom_call.1} parent=1 // pred_region
      %23 = vsyncadd [#allocation4], 0
      %s24 = sshll.u32 %s3, 4
      %s25 = int_to_ptr.hbm [resolvable:$true] %s24
      %s26 = sshll.u32 [#allocation3], 4
      %s27 = int_to_ptr.vmem [resolvable:$true] %s26
      %32 = dma.hbm_to_vmem [thread:$0]  %s25, 256, %s27, [#allocation4], 64, 64, 4
    $region17: #{tpu_custom_call.1} parent=1 // pred_fallthru
      _
    // Predicated region
    $region18: #{tpu_custom_call.1} parent=1 // pred_check
      _
    $region19: #{tpu_custom_call.1} parent=1 // pred_check_branch
      %34 = sbr.rel (0) target = $region21
    $region20: #{tpu_custom_call.1} parent=1 // pred_region
      _
    $region21: #{tpu_custom_call.1} parent=1 // pred_fallthru
      _
    // Predicated region
    $region22: #{tpu_custom_call.1} parent=1 // pred_check
      _
    $region23: #{tpu_custom_call.1} parent=1 // pred_check_branch
      %36 = sbr.rel (0) target = $region25
    $region24: #{tpu_custom_call.1} parent=1 // pred_region
      %38 = vsyncadd [#allocation7], 0
      %s40 = sshll.u32 %s5, 4
      %s41 = int_to_ptr.hbm [resolvable:$true] %s40
      %s42 = sshll.u32 [#allocation6], 4
      %s43 = int_to_ptr.vmem [resolvable:$true] %s42
      %45 = dma.hbm_to_vmem [thread:$0]  %s41, 128, %s43, [#allocation7]
    $region25: #{tpu_custom_call.1} parent=1 // pred_fallthru
      _
    // Predicated region
    $region26: #{tpu_custom_call.1} parent=1 // pred_check
      _
    $region27: #{tpu_custom_call.1} parent=1 // pred_check_branch
      %47 = sbr.rel (0) target = $region29
    $region28: #{tpu_custom_call.1} parent=1 // pred_region
      %49 = dma.done [#allocation4], 256
    $region29: #{tpu_custom_call.1} parent=1 // pred_fallthru
      _
    // Predicated region
    $region30: #{tpu_custom_call.1} parent=1 // pred_check
      _
    $region31: #{tpu_custom_call.1} parent=1 // pred_check_branch
      %51 = sbr.rel (0) target = $region33
    $region32: #{tpu_custom_call.1} parent=1 // pred_region
      %53 = dma.done [#allocation7], 128
    $region33: #{tpu_custom_call.1} parent=1 // pred_fallthru
      _
    %v55 = vld [vmem:[%s0] sm:$0xff]
    %v56 = vld [vmem:[%s0 + $0x8] sm:$0xff]
    %v57 = vld [vmem:[#allocation6] sm:$0xff]
    %vm58 = vcmask 261120
    %v59 = vsel %vm58, %v55, -inf
    %60 = vmax.xlane.f32.xlu0 %v59
    %v61 = vpop.xlane.xlu0 %60
    %v62 = vsel %vm58, %v56, -inf
    %63 = vmax.xlane.f32.xlu0 %v62
    %v64 = vpop.xlane.xlu0 %63
    %v65 = vsub.f32 %v55, %v61
    %v66 = vsub.f32 %v56, %v64
    %v67 = vmul.f32 %v65, 5.0
    %v68 = vmul.f32 %v66, 5.0
    %v69 = vmul.f32 %v67, 1.442695
    %v70 = vpow.pop %v69
    %v71 = vmul.f32 %v68, 1.442695
    %v72 = vpow.pop %v71
    %v73 = vpack.c.bf16 %v72, %v70
    %v74 = vld [vmem:[%s1] sm:$0xf]
    %v75 = vld [vmem:[%s1 + $0x4] sm:$0xf]
    %v76 = vld [vmem:[%s1 + $0x8] sm:$0xf]
    %v77 = vld [vmem:[%s1 + $0xc] sm:$0xf]
    %v82 = vunpack.c.l.b16 %v74
    %v83 = vunpack.c.l.b16 %v75
    %v84 = vunpack.c.l.b16 %v76
    %v85 = vunpack.c.l.b16 %v77
    %v86 = vpack.c.b16 %v83, %v82
    %v87 = vpack.c.b16 %v85, %v84
    %v91 = vsel %vm58, %v73, 0
    %93 = vmatpush.bf16.msra.mxu0 0
    %94 = vmatpush.bf16.msra.mxu0 0
    %95 = vmatpush.bf16.msra.mxu0 0
    %96 = vmatpush.bf16.msra.mxu0 0
    %97 = vmatpush.bf16.msra.mxu0 0
    %98 = vmatpush.bf16.msra.mxu0 0
    %99 = vmatpush.bf16.msra.mxu0 %v87
    %100 = vmatpush.bf16.msra.mxu0 %v86
    %101 = vmatmul.bf16.gmra.mxu0 %v91
    %v102 = vpop.f32.mrf.mxu0
    %v103 = vadd.f32 0.0, %v102
    %v104 = vpop.f32.mrf.mxu0
    %v105 = vadd.f32 0.0, %v104
    %106 = vdwg.mxu0
    %v107 = vperm.slane %v57, 0
    %v108 = vadd.f32 %v61, %v107
    %v109 = vadd.f32 %v64, %v107
    %v110 = vmax.f32 %v103, 1.1754944e-38
    %v111 = vmax.f32 %v105, 1.1754944e-38
    %v112 = vlog2.pop %v110
    %v113 = vmul.f32 %v112, 0.6931472
    %v114 = vlog2.pop %v111
    %v115 = vmul.f32 %v114, 0.6931472
    %v116 = vmul.f32 %v113, 0.2
    %v117 = vmul.f32 %v115, 0.2
    %v118 = vadd.f32 %v108, %v116
    %v119 = vadd.f32 %v109, %v117
    %v120 = vsel %vm58, %v55, inf
    %121 = vmin.xlane.f32.xlu0 %v120
    %v122 = vpop.xlane.xlu0 %121
    %v123 = vsel %vm58, %v56, inf
    %124 = vmin.xlane.f32.xlu0 %v123
    %v125 = vpop.xlane.xlu0 %124
    %v126 = vsub.f32 %v122, %v55
    %v127 = vsub.f32 %v125, %v56
    %v128 = vmul.f32 %v126, 5.0
    %v129 = vmul.f32 %v127, 5.0
    %v130 = vmul.f32 %v128, 1.442695
    %v131 = vpow.pop %v130
    %v132 = vmul.f32 %v129, 1.442695
    %v133 = vpow.pop %v132
    %v134 = vpack.c.bf16 %v133, %v131
    %v135 = vld [vmem:[%s2] sm:$0xf]
    %v136 = vld [vmem:[%s2 + $0x4] sm:$0xf]
    %v137 = vld [vmem:[%s2 + $0x8] sm:$0xf]
    %v138 = vld [vmem:[%s2 + $0xc] sm:$0xf]
    %v143 = vunpack.c.l.b16 %v135
    %v144 = vunpack.c.l.b16 %v136
    %v145 = vunpack.c.l.b16 %v137
    %v146 = vunpack.c.l.b16 %v138
    %v147 = vpack.c.b16 %v144, %v143
    %v148 = vpack.c.b16 %v146, %v145
    %v152 = vsel %vm58, %v134, 0
    %154 = vmatpush.bf16.msra.mxu0 0
    %155 = vmatpush.bf16.msra.mxu0 0
    %156 = vmatpush.bf16.msra.mxu0 0
    %157 = vmatpush.bf16.msra.mxu0 0
    %158 = vmatpush.bf16.msra.mxu0 0
    %159 = vmatpush.bf16.msra.mxu0 0
    %160 = vmatpush.bf16.msra.mxu0 %v148
    %161 = vmatpush.bf16.msra.mxu0 %v147
    %162 = vmatmul.bf16.gmra.mxu0 %v152
    %v163 = vpop.f32.mrf.mxu0
    %v164 = vadd.f32 0.0, %v163
    %v165 = vpop.f32.mrf.mxu0
    %v166 = vadd.f32 0.0, %v165
    %167 = vdwg.mxu0
    %v168 = vperm.slane %v57, 1
    %v169 = vadd.f32 %v122, %v168
    %v170 = vadd.f32 %v125, %v168
    %v171 = vmax.f32 %v164, 1.1754944e-38
    %v172 = vmax.f32 %v166, 1.1754944e-38
    %v173 = vlog2.pop %v171
    %v174 = vmul.f32 %v173, 0.6931472
    %v175 = vlog2.pop %v172
    %v176 = vmul.f32 %v175, 0.6931472
    %v177 = vmul.f32 %v174, 0.2
    %v178 = vmul.f32 %v176, 0.2
    %v179 = vsub.f32 %v169, %v177
    %v180 = vsub.f32 %v170, %v178
    %v181 = vsub.f32 %v118, %v179
    %v182 = vsub.f32 %v119, %v180
    %v183 = vpack.c.bf16 %v56, %v55
    %v184 = vld [vmem:[#allocation3] sm:$0xf]
    %v185 = vld [vmem:[#allocation3 + $0x4] sm:$0xf]
    %v186 = vld [vmem:[#allocation3 + $0x8] sm:$0xf]
    %v187 = vld [vmem:[#allocation3 + $0xc] sm:$0xf]
    %v188 = vperm.slane %v57, 2
    %v193 = vunpack.c.l.b16 %v184
    %v194 = vunpack.c.l.b16 %v185
    %v195 = vunpack.c.l.b16 %v186
    %v196 = vunpack.c.l.b16 %v187
    %v197 = vpack.c.b16 %v194, %v193
    %v198 = vpack.c.b16 %v196, %v195
    %v202 = vsel %vm58, %v183, 0
    %204 = vmatpush.bf16.msra.mxu0 0
    %205 = vmatpush.bf16.msra.mxu0 0
    %206 = vmatpush.bf16.msra.mxu0 0
    %207 = vmatpush.bf16.msra.mxu0 0
    %208 = vmatpush.bf16.msra.mxu0 0
    %209 = vmatpush.bf16.msra.mxu0 0
    %210 = vmatpush.bf16.msra.mxu0 %v198
    %211 = vmatpush.bf16.msra.mxu0 %v197
    %212 = vmatmul.bf16.gmra.mxu0 %v202
    %v213 = vpop.f32.mrf.mxu0
    %v214 = vadd.f32 %v188, %v213
    %v215 = vpop.f32.mrf.mxu0
    %v216 = vadd.f32 %v188, %v215
    %217 = vdwg.mxu0
    %v218 = vmul.f32 %v214, 0.5
    %v219 = vmul.f32 %v216, 0.5
    %v220 = vtanh.pop %v218
    %v221 = vtanh.pop %v219
    %v222 = vadd.f32 %v220, 1.0
    %v223 = vadd.f32 %v221, 1.0
    %v224 = vmul.f32 %v222, 0.5
    %v225 = vmul.f32 %v223, 0.5
    %v226 = vmul.f32 %v224, %v118
    %v227 = vmul.f32 %v225, %v119
    %v228 = vpack.c.bf16 %v226, %v226
    %v229 = vpack.c.bf16 %v227, %v227
    %vm230 = vcmask 257024
    %231 = vst.msk [vmem:[#allocation2] sm:$0xf] %vm230, %v228
    %232 = vst.msk [vmem:[#allocation2 + $0x4] sm:$0xf] %vm230, %v229
    %v233 = vsub.f32 1.0, %v224
    %v234 = vsub.f32 1.0, %v225
    %v235 = vmul.f32 %v233, %v181
    %v236 = vmul.f32 %v234, %v182
    %v237 = vpack.c.bf16 %v235, %v235
    %v238 = vpack.c.bf16 %v236, %v236
    %241 = vrot.lane.b32.xlu0 %v237, 32
    %v242 = vpop.permute.xlu0 %241
    %243 = vrot.lane.b32.xlu0 %v238, 32
    %v244 = vpop.permute.xlu0 %243
    %vm247 = vcmask 519424
    %248 = vst.msk [vmem:[#allocation2] sm:$0xf] %vm247, %v242
    %249 = vst.msk [vmem:[#allocation2 + $0x4] sm:$0xf] %vm247, %v244
    %v250 = vld [vmem:[#allocation2] sm:$0xf]
    %v251 = vld [vmem:[#allocation2 + $0x4] sm:$0xf]
    %v252 = vld [vmem:[%s4] sm:$0xf]
    %v253 = vld [vmem:[%s4 + $0x4] sm:$0xf]
    %v254 = vld [vmem:[%s4 + $0x8] sm:$0xf]
    %v255 = vld [vmem:[%s4 + $0xc] sm:$0xf]
    %v256 = vld [vmem:[%s4 + $0x10] sm:$0xf]
    %v257 = vld [vmem:[%s4 + $0x14] sm:$0xf]
    %v258 = vld [vmem:[%s4 + $0x18] sm:$0xf]
    %v259 = vld [vmem:[%s4 + $0x1c] sm:$0xf]
    %v260 = vperm.slane %v57, 3
    %v263 = vunpack.c.l.b16 %v250
    %v264 = vunpack.c.l.b16 %v251
    %v265 = vpack.c.b16 %v264, %v263
    %v274 = vunpack.c.l.b16 %v252
    %v275 = vunpack.c.l.b16 %v253
    %v276 = vunpack.c.l.b16 %v254
    %v277 = vunpack.c.l.b16 %v255
    %v278 = vunpack.c.l.b16 %v256
    %v279 = vunpack.c.l.b16 %v257
    %v280 = vunpack.c.l.b16 %v258
    %v281 = vunpack.c.l.b16 %v259
    %v282 = vpack.c.b16 %v275, %v274
    %v283 = vpack.c.b16 %v277, %v276
    %v284 = vpack.c.b16 %v279, %v278
    %v285 = vpack.c.b16 %v281, %v280
    %vm290 = vcmask 523264
    %v292 = vsel %vm290, %v265, 0
    %294 = vmatpush.bf16.msra.mxu0 0
    %295 = vmatpush.bf16.msra.mxu0 0
    %296 = vmatpush.bf16.msra.mxu0 0
    %297 = vmatpush.bf16.msra.mxu0 0
    %298 = vmatpush.bf16.msra.mxu0 %v285
    %299 = vmatpush.bf16.msra.mxu0 %v284
    %300 = vmatpush.bf16.msra.mxu0 %v283
    %301 = vmatpush.bf16.msra.mxu0 %v282
    %302 = vmatmul.bf16.gmra.mxu0 %v292
    %v303 = vpop.f32.mrf.mxu0
    %v304 = vadd.f32 %v260, %v303
    %v305 = vpop.f32.mrf.mxu0
    %v306 = vadd.f32 %v260, %v305
    %307 = vdwg.mxu0
    %v308 = vadd.f32 %v55, %v304
    %v309 = vadd.f32 %v56, %v306
    %v310 = vsel %vm58, %v308, 0.0
    %311 = vadd.xlane.f32.xlu0 %v310
    %v312 = vpop.xlane.xlu0 %311
    %v313 = vsel %vm58, %v309, 0.0
    %314 = vadd.xlane.f32.xlu0 %v313
    %v315 = vpop.xlane.xlu0 %314
    %v316 = vrcp.pop 32.0
    %v317 = vmul.f32 32.0, %v316
    %v318 = vsub.f32 1.0, %v317
    %v319 = vmul.f32 %v316, %v318
    %v320 = vadd.f32 %v316, %v319
    %vm321 = vweird.f32 %v316
    %v322 = vsel %vm321, %v316, %v320
    %v323 = vmul.f32 %v312, %v322
    %v324 = vmul.f32 %v315, %v322
    %v325 = vsub.f32 %v308, %v323
    %v326 = vsub.f32 %v309, %v324
    %v327 = vmul.f32 %v325, %v325
    %v328 = vmul.f32 %v326, %v326
    %v329 = vsel %vm58, %v327, 0.0
    %330 = vadd.xlane.f32.xlu0 %v329
    %v331 = vpop.xlane.xlu0 %330
    %v332 = vsel %vm58, %v328, 0.0
    %333 = vadd.xlane.f32.xlu0 %v332
    %v334 = vpop.xlane.xlu0 %333
    %v335 = vmul.f32 %v331, %v322
    %v336 = vmul.f32 %v334, %v322
    %v337 = vadd.f32 %v335, 1e-05
    %v338 = vadd.f32 %v336, 1e-05
    %v339 = vrsqrt.pop %v337
    %v340 = vmul.f32 %v339, %v337
    %v341 = vmul.f32 %v340, %v339
    %v342 = vmul.f32 0.5, %v341
    %v343 = vsub.f32 1.5, %v342
    %v344 = vmul.f32 %v339, %v343
    %vm345 = vweird.f32 %v337
    %vm346 = vweird.f32 %v339
    %vm347 = vmor %vm345, %vm346
    %v348 = vsel %vm347, %v339, %v344
    %v349 = vrsqrt.pop %v338
    %v350 = vmul.f32 %v349, %v338
    %v351 = vmul.f32 %v350, %v349
    %v352 = vmul.f32 0.5, %v351
    %v353 = vsub.f32 1.5, %v352
    %v354 = vmul.f32 %v349, %v353
    %vm355 = vweird.f32 %v338
    %vm356 = vweird.f32 %v349
    %vm357 = vmor %vm355, %vm356
    %v358 = vsel %vm357, %v349, %v354
    %v359 = vmul.f32 %v325, %v348
    %v360 = vmul.f32 %v326, %v358
    %v361 = vperm.slane %v57, 4
    %v362 = vmul.f32 %v359, %v361
    %v363 = vmul.f32 %v360, %v361
    %v364 = vperm.slane %v57, 5
    %v365 = vadd.f32 %v362, %v364
    %v366 = vadd.f32 %v363, %v364
    %367 = vst.msk [vmem:[#allocation8] sm:$0xff] %vm58, %v365
    %368 = vst.msk [vmem:[#allocation8 + $0x8] sm:$0xff] %vm58, %v366
    // Predicated region
    $region34: #{tpu_custom_call.1} parent=1 // pred_check
      _
    $region35: #{tpu_custom_call.1} parent=1 // pred_check_branch
      %370 = sbr.rel (0) target = $region37
    $region36: #{tpu_custom_call.1} parent=1 // pred_region
      %372 = vsyncadd [#allocation5], 0
      %s373 = sshll.u32 [#allocation8], 4
      %s374 = int_to_ptr.vmem [resolvable:$true] %s373
      %s375 = sshll.u32 %s6, 4
      %s376 = int_to_ptr.hbm [resolvable:$true] %s375
      %381 = dma.vmem_to_hbm [thread:$0]  %s374, 256, %s376, [#allocation5], 128, 128, 8
    $region37: #{tpu_custom_call.1} parent=1 // pred_fallthru
      _
    // Predicated region
    $region38: #{tpu_custom_call.1} parent=1 // pred_check
      _
    $region39: #{tpu_custom_call.1} parent=1 // pred_check_branch
      %383 = sbr.rel (0) target = $region41
    $region40: #{tpu_custom_call.1} parent=1 // pred_region
      %385 = dma.done [#allocation5], 256
    $region41: #{tpu_custom_call.1} parent=1 // pred_fallthru
      _
    %386 = vsyncpa [#allocation4], 1
    %387 = vsyncpa [#allocation7], 1
    %388 = vsyncpa [#allocation5], 1

</llo_original>
